<compile_context>
chip_gen: v5e
topology: v5e:2x2
jax: 0.10.0
libtpu: 0.0.40
codegen_flags: <defaults>
</compile_context>

<pallas_src>
import functools

import jax
import jax.numpy as jnp
import numpy as np
from jax.experimental import pallas as pl
from jax.experimental.pallas import tpu as pltpu

LANE = 128  # TPU lane width


def classification_kernel(x_ref, w_emb_ref, b_emb_ref, w_fc_ref, b_fc_ref,
                          alpha_ref, out_ref):
    """Fused: embed -> PReLU -> fc1 (VPU FMAs) -> log_softmax on one batch tile."""
    x = x_ref[...]                                                   # (TB, D) bf16

    # embedding_net: Linear(D, 2), output lane-padded to 128 (pad weight cols are 0)
    emb = jnp.dot(x, w_emb_ref[...],
                  preferred_element_type=jnp.float32) + b_emb_ref[...]   # (TB, 128) f32

    # PReLU with a single shared parameter (nn.PReLU() default), alpha from SMEM
    alpha = alpha_ref[0, 0]
    act = jnp.where(emb > 0, emb, alpha * emb)                       # (TB, 128) f32

    # fc1: Linear(2, n_classes) -> K=2 is far too narrow for the MXU, so do it as
    # VPU broadcast-FMAs over the (tiny, static) embedding dim.
    logits = jnp.broadcast_to(b_fc_ref[...], (act.shape[0], b_fc_ref.shape[1]))
    for j in range(w_fc_ref.shape[0]):                               # static unroll (2)
        logits = logits + act[:, j:j + 1] * w_fc_ref[j:j + 1, :]     # (TB, C_pad)

    # log_softmax over the last axis (padded lanes carry a -1e30 bias -> exp() == 0)
    m = jnp.max(logits, axis=-1, keepdims=True)
    z = logits - m
    lse = jnp.log(jnp.sum(jnp.exp(z), axis=-1, keepdims=True))
    out_ref[...] = z - lse


def _round_up(v, m):
    return ((v + m - 1) // m) * m


def _choose_batch_tile(batch, feat_dim):
    """Batch tile: largest multiple of 8 keeping 2 bf16 x buffers under ~4 MiB total.

    Conservative for v7x's 64 MiB VMEM / 32 MiB scoped default; bigger tiles only
    help a memory-bound kernel up to ~85% of HBM roofline anyway.
    """
    budget_rows = max(8, (2 * 1024 * 1024) // max(feat_dim * 2, 1))  # ~2 MiB / buffer
    tb = min(1024, budget_rows)
    tb = max(8, (tb // 8) * 8)
    tb = min(tb, _round_up(batch, 8))
    return tb


@functools.partial(jax.jit, static_argnames=("n_classes",))
def classification_net(x_nchw, w_emb, b_emb, prelu_alpha, w_fc1, b_fc1, *, n_classes):
    """Wrapper: flatten NCHW, pad to lane/sublane-friendly shapes, run the fused kernel."""
    B = x_nchw.shape[0]
    x_flat = x_nchw.reshape(B, -1)
    D = x_flat.shape[1]
    emb_dim = w_emb.shape[0]                                   # 2 per the spec

    c_pad = _round_up(max(n_classes, 1), LANE)                 # lane-dense logits/output
    tb = _choose_batch_tile(B, D)
    b_pad = _round_up(B, tb)
    grid = (b_pad // tb,)

    # ---- operand prep (bf16 activations/weights, f32 everywhere else) ----
    x_p = jnp.zeros((b_pad, D), jnp.bfloat16).at[:B].set(x_flat.astype(jnp.bfloat16))

    w_emb_p = jnp.zeros((D, LANE), jnp.bfloat16).at[:, :emb_dim].set(
        jnp.transpose(w_emb).astype(jnp.bfloat16))             # (D, 128), zero-padded cols
    b_emb_p = jnp.zeros((1, LANE), jnp.float32).at[0, :emb_dim].set(
        b_emb.astype(jnp.float32))                             # (1, 128)

    w_fc_t = jnp.transpose(w_fc1).astype(jnp.float32)          # (2, n_classes)
    w_fc_p = jnp.zeros((emb_dim, c_pad), jnp.float32).at[:, :n_classes].set(w_fc_t)
    # padded class lanes get a huge negative bias so they never affect the softmax
    b_fc_p = jnp.full((1, c_pad), -1e30, jnp.float32).at[0, :n_classes].set(
        b_fc1.astype(jnp.float32))

    alpha_sm = jnp.reshape(prelu_alpha, (1, 1)).astype(jnp.float32)  # SMEM scalar

    out_pad = pl.pallas_call(
        classification_kernel,
        out_shape=jax.ShapeDtypeStruct((b_pad, c_pad), jnp.float32),
        grid=grid,
        in_specs=[
            pl.BlockSpec((tb, D), lambda i: (i, 0)),              # x: tiled over batch
            pl.BlockSpec((D, LANE), lambda i: (0, 0)),            # w_emb: resident
            pl.BlockSpec((1, LANE), lambda i: (0, 0)),            # b_emb: resident
            pl.BlockSpec((emb_dim, c_pad), lambda i: (0, 0)),     # w_fc: resident
            pl.BlockSpec((1, c_pad), lambda i: (0, 0)),           # b_fc: resident
            pl.BlockSpec(memory_space=pltpu.MemorySpace.SMEM),    # alpha scalar
        ],
        out_specs=pl.BlockSpec((tb, c_pad), lambda i: (i, 0)),
        compiler_params=pltpu.CompilerParams(
            dimension_semantics=("parallel",),                    # 2 TCs on v7x
            vmem_limit_bytes=32 * 1024 * 1024,
        ),
    )(x_p, w_emb_p, b_emb_p, w_fc_p, b_fc_p, alpha_sm)

    return out_pad[:B, :n_classes]


def _reference(x_nchw, w_emb, b_emb, alpha, w_fc1, b_fc1):
    """Pure-JAX reference (inputs rounded to bf16 to mirror the kernel's HBM dtype)."""
    x = x_nchw.reshape(x_nchw.shape[0], -1)
    xb = x.astype(jnp.bfloat16).astype(jnp.float32)
    wb = w_emb.astype(jnp.bfloat16).astype(jnp.float32)
    emb = xb @ wb.T + b_emb
    act = jnp.where(emb > 0, emb, alpha * emb)
    logits = act @ w_fc1.T + b_fc1
    return jax.nn.log_softmax(logits, axis=-1)


if __name__ == "__main__":
    key = jax.random.PRNGKey(0)
    k_x, k_we, k_be, k_wf, k_bf = jax.random.split(key, 5)

    B, C, H, W = 2, 4, 16, 16          # small NCHW input
    D = C * H * W                      # flattened feature dim = 1024
    EMB = 2                            # embedding dim (fc1 = Linear(2, n_classes))
    N_CLASSES = 10

    x = jax.random.normal(k_x, (B, C, H, W), dtype=jnp.float32)

    # Deterministic synthetic parameters (no checkpoint loading).
    w_emb = 0.02 * jax.random.normal(k_we, (EMB, D), dtype=jnp.float32)   # Linear(D, 2).weight
    b_emb = 0.01 * jax.random.normal(k_be, (EMB,), dtype=jnp.float32)     # Linear(D, 2).bias
    prelu_alpha = jnp.asarray(0.25, dtype=jnp.float32)                    # nn.PReLU() default
    w_fc1 = 0.5 * jax.random.normal(k_wf, (N_CLASSES, EMB), dtype=jnp.float32)  # fc1.weight
    b_fc1 = 0.1 * jax.random.normal(k_bf, (N_CLASSES,), dtype=jnp.float32)      # fc1.bias

    scores = classification_net(x, w_emb, b_emb, prelu_alpha, w_fc1, b_fc1,
                                n_classes=N_CLASSES)
    scores = jax.block_until_ready(scores)

    ref = _reference(x, w_emb, b_emb, prelu_alpha, w_fc1, b_fc1)
    assert scores.shape == (B, N_CLASSES)
    np.testing.assert_allclose(np.asarray(scores), np.asarray(ref),
                               atol=5e-4, rtol=5e-4)

    print("KERNEL_OK")
</pallas_src>

<mosaic_0001>
module attributes {stable_mosaic.version = 11 : i64} {
  func.func @classification_kernel(%arg0: i32, %arg1: memref<8x1024xbf16, #tpu.memory_space<vmem>>, %arg2: memref<1024x128xbf16, #tpu.memory_space<vmem>>, %arg3: memref<1x128xf32, #tpu.memory_space<vmem>>, %arg4: memref<2x128xf32, #tpu.memory_space<vmem>>, %arg5: memref<1x128xf32, #tpu.memory_space<vmem>>, %arg6: memref<1x1xf32, #tpu.memory_space<smem>>, %arg7: memref<8x128xf32, #tpu.memory_space<vmem>>) attributes {dimension_semantics = [#tpu.dimension_semantics<parallel>], iteration_bounds = array<i64: 1>, scalar_prefetch = 0 : i64, scratch_operands = 0 : i64, tpu.core_type = #tpu.core_type<tc>, window_params = [{transform_indices = @transform_0, window_bounds = array<i64: 8, 1024>}, {pipeline_mode = #tpu.pipeline_mode<synchronous>, transform_indices = @transform_1, window_bounds = array<i64: 1024, 128>}, {pipeline_mode = #tpu.pipeline_mode<synchronous>, transform_indices = @transform_2, window_bounds = array<i64: 1, 128>}, {pipeline_mode = #tpu.pipeline_mode<synchronous>, transform_indices = @transform_3, window_bounds = array<i64: 2, 128>}, {pipeline_mode = #tpu.pipeline_mode<synchronous>, transform_indices = @transform_4, window_bounds = array<i64: 1, 128>}, {transform_indices = @transform_5, window_bounds = array<i64: 1, 1>}, {transform_indices = @transform_6, window_bounds = array<i64: 8, 128>}]} {
    %c0 = arith.constant 0 : index
    %c0_0 = arith.constant 0 : index
    %0 = vector.load %arg1[%c0, %c0_0] : memref<8x1024xbf16, #tpu.memory_space<vmem>>, vector<8x1024xbf16>
    %c0_1 = arith.constant 0 : index
    %c0_2 = arith.constant 0 : index
    %1 = vector.load %arg2[%c0_1, %c0_2] : memref<1024x128xbf16, #tpu.memory_space<vmem>>, vector<1024x128xbf16>
    %cst = arith.constant dense<0.000000e+00> : vector<8x128xf32>
    %2 = tpu.matmul %0, %1, %cst {dimension_numbers = #tpu.dot_dimension_numbers<[1], [0], [0], [1], [0, 0, 1, 1], [], []>} : vector<8x1024xbf16>, vector<1024x128xbf16>, vector<8x128xf32> -> vector<8x128xf32>
    %c0_3 = arith.constant 0 : index
    %c0_4 = arith.constant 0 : index
    %3 = vector.load %arg3[%c0_3, %c0_4] : memref<1x128xf32, #tpu.memory_space<vmem>>, vector<1x128xf32>
    %4 = vector.broadcast %3 : vector<1x128xf32> to vector<8x128xf32>
    %5 = arith.addf %2, %4 : vector<8x128xf32>
    %c0_5 = arith.constant 0 : index
    %c0_6 = arith.constant 0 : index
    %6 = memref.load %arg6[%c0_5, %c0_6] : memref<1x1xf32, #tpu.memory_space<smem>>
    %cst_7 = arith.constant 0.000000e+00 : f32
    %7 = vector.broadcast %cst_7 : f32 to vector<8x128xf32>
    %8 = arith.cmpf ogt, %5, %7 : vector<8x128xf32>
    %9 = vector.broadcast %6 : f32 to vector<8x128xf32>
    %10 = arith.mulf %9, %5 : vector<8x128xf32>
    %11 = arith.select %8, %5, %10 : vector<8x128xi1>, vector<8x128xf32>
    %c0_8 = arith.constant 0 : index
    %c0_9 = arith.constant 0 : index
    %12 = vector.load %arg5[%c0_8, %c0_9] : memref<1x128xf32, #tpu.memory_space<vmem>>, vector<1x128xf32>
    %13 = vector.shape_cast %12 : vector<1x128xf32> to vector<1x128xf32>
    %14 = vector.broadcast %13 : vector<1x128xf32> to vector<8x128xf32>
    %15 = vector.extract_strided_slice %11 {offsets = [0, 0], sizes = [8, 1], strides = [1, 1]} : vector<8x128xf32> to vector<8x1xf32>
    %c0_10 = arith.constant 0 : index
    %c0_11 = arith.constant 0 : index
    %16 = vector.load %arg4[%c0_10, %c0_11] : memref<2x128xf32, #tpu.memory_space<vmem>>, vector<1x128xf32>
    %17 = vector.broadcast %15 : vector<8x1xf32> to vector<8x128xf32>
    %18 = vector.broadcast %16 : vector<1x128xf32> to vector<8x128xf32>
    %19 = arith.mulf %17, %18 : vector<8x128xf32>
    %20 = arith.addf %14, %19 : vector<8x128xf32>
    %21 = vector.extract_strided_slice %11 {offsets = [0, 1], sizes = [8, 1], strides = [1, 1]} : vector<8x128xf32> to vector<8x1xf32>
    %c1 = arith.constant 1 : index
    %c0_12 = arith.constant 0 : index
    %22 = vector.load %arg4[%c1, %c0_12] : memref<2x128xf32, #tpu.memory_space<vmem>>, vector<1x128xf32>
    %23 = vector.broadcast %21 : vector<8x1xf32> to vector<8x128xf32>
    %24 = vector.broadcast %22 : vector<1x128xf32> to vector<8x128xf32>
    %25 = arith.mulf %23, %24 : vector<8x128xf32>
    %26 = arith.addf %20, %25 : vector<8x128xf32>
    %cst_13 = arith.constant dense<0xFF800000> : vector<8xf32>
    %27 = vector.multi_reduction <maximumf>, %26, %cst_13 [1] : vector<8x128xf32> to vector<8xf32>
    %28 = vector.shape_cast %27 : vector<8xf32> to vector<8x1xf32>
    %29 = vector.broadcast %28 : vector<8x1xf32> to vector<8x128xf32>
    %30 = arith.subf %26, %29 : vector<8x128xf32>
    %31 = math.exp %30 : vector<8x128xf32>
    %cst_14 = arith.constant dense<0.000000e+00> : vector<8xf32>
    %32 = vector.multi_reduction <add>, %31, %cst_14 [1] : vector<8x128xf32> to vector<8xf32>
    %33 = vector.shape_cast %32 : vector<8xf32> to vector<8x1xf32>
    %34 = math.log %33 : vector<8x1xf32>
    %35 = vector.broadcast %34 : vector<8x1xf32> to vector<8x128xf32>
    %36 = arith.subf %30, %35 : vector<8x128xf32>
    %c0_15 = arith.constant 0 : index
    %c0_16 = arith.constant 0 : index
    %37 = vector.load %arg7[%c0_15, %c0_16] : memref<8x128xf32, #tpu.memory_space<vmem>>, vector<8x128xf32>
    tpu.vector_store %arg7[%c0_15, %c0_16], %36 {strides = array<i32>} : memref<8x128xf32, #tpu.memory_space<vmem>>, vector<8x128xf32>,
    return
  }
  func.func @transform_0(%arg0: i32) -> (i32, i32) {
    %c0_i32 = arith.constant 0 : i32
    %c0_i32_0 = arith.constant 0 : i32
    return %arg0, %c0_i32 : i32, i32
  }
  func.func @transform_1(%arg0: i32) -> (i32, i32) {
    %c0_i32 = arith.constant 0 : i32
    %c0_i32_0 = arith.constant 0 : i32
    %c0_i32_1 = arith.constant 0 : i32
    return %c0_i32, %c0_i32_0 : i32, i32
  }
  func.func @transform_2(%arg0: i32) -> (i32, i32) {
    %c0_i32 = arith.constant 0 : i32
    %c0_i32_0 = arith.constant 0 : i32
    %c0_i32_1 = arith.constant 0 : i32
    return %c0_i32, %c0_i32_0 : i32, i32
  }
  func.func @transform_3(%arg0: i32) -> (i32, i32) {
    %c0_i32 = arith.constant 0 : i32
    %c0_i32_0 = arith.constant 0 : i32
    %c0_i32_1 = arith.constant 0 : i32
    return %c0_i32, %c0_i32_0 : i32, i32
  }
  func.func @transform_4(%arg0: i32) -> (i32, i32) {
    %c0_i32 = arith.constant 0 : i32
    %c0_i32_0 = arith.constant 0 : i32
    %c0_i32_1 = arith.constant 0 : i32
    return %c0_i32, %c0_i32_0 : i32, i32
  }
  func.func @transform_5(%arg0: i32) -> (i32, i32) {
    %c0_i32 = arith.constant 0 : i32
    %c0_i32_0 = arith.constant 0 : i32
    %c0_i32_1 = arith.constant 0 : i32
    return %c0_i32, %c0_i32_0 : i32, i32
  }
  func.func @transform_6(%arg0: i32) -> (i32, i32) {
    %c0_i32 = arith.constant 0 : i32
    %c0_i32_0 = arith.constant 0 : i32
    return %arg0, %c0_i32 : i32, i32
  }
}

</mosaic_0001>

<llo_original>
// kernel: classification_net.1
$region0: #{classification_net.1}
  #allocation0 [shape = 'u32[]', space=smem, size = 0x4, offset = 0x4, fixed_abs, tag = 'smem constant byte address 0x4 - core index']
  #allocation1 [shape = 'u32[72,128]{1,0:T(1,128)}', space=vmem, size = 0x9000, scoped, tag = 'internal scratch']
  #allocation2 [shape = 'f32[1,1]{1,0:T(1,128)S(6)}', space=smem, size = 0x200, scoped, tag = 'scoped memory for classification_net.1']
  %s0 = inlined_call_operand.vmem [shape: bf16[8,1024], index: 0, kind: input, shape index: {}]
  %s1 = inlined_call_operand.vmem [shape: bf16[1024,128], index: 1, kind: input, shape index: {}]
  %s2 = inlined_call_operand.vmem [shape: f32[1,128], index: 2, kind: input, shape index: {}]
  %s3 = inlined_call_operand.vmem [shape: f32[2,128], index: 3, kind: input, shape index: {}]
  %s4 = inlined_call_operand.vmem [shape: f32[1,128], index: 4, kind: input, shape index: {}]
  %s5 = inlined_call_operand.<no memory space> [shape: f32[1,1], index: 5, kind: input, shape index: {}]
  %s6 = inlined_call_operand.vmem [shape: f32[8,128], index: 6, kind: output, shape index: {}]
  %s7 = sld [smem:[#allocation0]]
  $region34: #{classification_net.1} parent=0
    _
  %s9 = ssub.s32 1, %s7
  %s10 = scalar_select 0, %s9, %s7
  %11 = sst [smem:[#allocation2]] %s5
  // Predicated region
  $region2: #{classification_net.1} parent=0 // pred_check
    _
  $region3: #{classification_net.1} parent=0 // pred_check_branch
    %13 = sbr.rel (0) target = $region5
  $region4: #{classification_net.1} parent=0 // pred_region
    _
  $region5: #{classification_net.1} parent=0 // pred_fallthru
    _
  // Predicated region
  $region6: #{classification_net.1} parent=0 // pred_check
    _
  $region7: #{classification_net.1} parent=0 // pred_check_branch
    %15 = sbr.rel (0) target = $region9
  $region8: #{classification_net.1} parent=0 // pred_region
    _
  $region9: #{classification_net.1} parent=0 // pred_fallthru
    _
  // Predicated region
  $region10: #{classification_net.1} parent=0 // pred_check
    _
  $region11: #{classification_net.1} parent=0 // pred_check_branch
    %17 = sbr.rel (0) target = $region13
  $region12: #{classification_net.1} parent=0 // pred_region
    _
  $region13: #{classification_net.1} parent=0 // pred_fallthru
    _
  // Predicated region
  $region14: #{classification_net.1} parent=0 // pred_check
    _
  $region15: #{classification_net.1} parent=0 // pred_check_branch
    %19 = sbr.rel (0) target = $region17
  $region16: #{classification_net.1} parent=0 // pred_region
    _
  $region17: #{classification_net.1} parent=0 // pred_fallthru
    _
  // Predicated region
  $region18: #{classification_net.1} parent=0 // pred_check
    _
  $region19: #{classification_net.1} parent=0 // pred_check_branch
    %21 = sbr.rel (0) target = $region21
  $region20: #{classification_net.1} parent=0 // pred_region
    _
  $region21: #{classification_net.1} parent=0 // pred_fallthru
    _
  // Predicated region
  $region22: #{classification_net.1} parent=0 // pred_check
    _
  $region23: #{classification_net.1} parent=0 // pred_check_branch
    %23 = sbr.rel (0) target = $region25
  $region24: #{classification_net.1} parent=0 // pred_region
    _
  $region25: #{classification_net.1} parent=0 // pred_fallthru
    _
  %v24 = vld [vmem:[%s0] sm:$0xff]
  %v25 = vld [vmem:[%s0 + $0x8] sm:$0xff]
  %v26 = vld [vmem:[%s0 + $0x10] sm:$0xff]
  %v27 = vld [vmem:[%s0 + $0x18] sm:$0xff]
  %v28 = vld [vmem:[%s1] sm:$0xf]
  %v29 = vld [vmem:[%s1 + $0x4] sm:$0xf]
  %v30 = vld [vmem:[%s1 + $0x8] sm:$0xf]
  %v31 = vld [vmem:[%s1 + $0xc] sm:$0xf]
  %v32 = vld [vmem:[%s1 + $0x10] sm:$0xf]
  %v33 = vld [vmem:[%s1 + $0x14] sm:$0xf]
  %v34 = vld [vmem:[%s1 + $0x18] sm:$0xf]
  %v35 = vld [vmem:[%s1 + $0x1c] sm:$0xf]
  %v36 = vld [vmem:[%s1 + $0x20] sm:$0xf]
  %v37 = vld [vmem:[%s1 + $0x24] sm:$0xf]
  %v38 = vld [vmem:[%s1 + $0x28] sm:$0xf]
  %v39 = vld [vmem:[%s1 + $0x2c] sm:$0xf]
  %v40 = vld [vmem:[%s1 + $0x30] sm:$0xf]
  %v41 = vld [vmem:[%s1 + $0x34] sm:$0xf]
  %v42 = vld [vmem:[%s1 + $0x38] sm:$0xf]
  %v43 = vld [vmem:[%s1 + $0x3c] sm:$0xf]
  %v44 = vld [vmem:[%s1 + $0x40] sm:$0xf]
  %v45 = vld [vmem:[%s1 + $0x44] sm:$0xf]
  %v46 = vld [vmem:[%s1 + $0x48] sm:$0xf]
  %v47 = vld [vmem:[%s1 + $0x4c] sm:$0xf]
  %v48 = vld [vmem:[%s1 + $0x50] sm:$0xf]
  %v49 = vld [vmem:[%s1 + $0x54] sm:$0xf]
  %v50 = vld [vmem:[%s1 + $0x58] sm:$0xf]
  %v51 = vld [vmem:[%s1 + $0x5c] sm:$0xf]
  %v52 = vld [vmem:[%s1 + $0x60] sm:$0xf]
  %v53 = vld [vmem:[%s1 + $0x64] sm:$0xf]
  %v54 = vld [vmem:[%s1 + $0x68] sm:$0xf]
  %v55 = vld [vmem:[%s1 + $0x6c] sm:$0xf]
  %v56 = vld [vmem:[%s1 + $0x70] sm:$0xf]
  %v57 = vld [vmem:[%s1 + $0x74] sm:$0xf]
  %v58 = vld [vmem:[%s1 + $0x78] sm:$0xf]
  %v59 = vld [vmem:[%s1 + $0x7c] sm:$0xf]
  %v60 = vld [vmem:[%s1 + $0x80] sm:$0xf]
  %v61 = vld [vmem:[%s1 + $0x84] sm:$0xf]
  %v62 = vld [vmem:[%s1 + $0x88] sm:$0xf]
  %v63 = vld [vmem:[%s1 + $0x8c] sm:$0xf]
  %v64 = vld [vmem:[%s1 + $0x90] sm:$0xf]
  %v65 = vld [vmem:[%s1 + $0x94] sm:$0xf]
  %v66 = vld [vmem:[%s1 + $0x98] sm:$0xf]
  %v67 = vld [vmem:[%s1 + $0x9c] sm:$0xf]
  %v68 = vld [vmem:[%s1 + $0xa0] sm:$0xf]
  %v69 = vld [vmem:[%s1 + $0xa4] sm:$0xf]
  %v70 = vld [vmem:[%s1 + $0xa8] sm:$0xf]
  %v71 = vld [vmem:[%s1 + $0xac] sm:$0xf]
  %v72 = vld [vmem:[%s1 + $0xb0] sm:$0xf]
  %v73 = vld [vmem:[%s1 + $0xb4] sm:$0xf]
  %v74 = vld [vmem:[%s1 + $0xb8] sm:$0xf]
  %v75 = vld [vmem:[%s1 + $0xbc] sm:$0xf]
  %v76 = vld [vmem:[%s1 + $0xc0] sm:$0xf]
  %v77 = vld [vmem:[%s1 + $0xc4] sm:$0xf]
  %v78 = vld [vmem:[%s1 + $0xc8] sm:$0xf]
  %v79 = vld [vmem:[%s1 + $0xcc] sm:$0xf]
  %v80 = vld [vmem:[%s1 + $0xd0] sm:$0xf]
  %v81 = vld [vmem:[%s1 + $0xd4] sm:$0xf]
  %v82 = vld [vmem:[%s1 + $0xd8] sm:$0xf]
  %v83 = vld [vmem:[%s1 + $0xdc] sm:$0xf]
  %v84 = vld [vmem:[%s1 + $0xe0] sm:$0xf]
  %v85 = vld [vmem:[%s1 + $0xe4] sm:$0xf]
  %v86 = vld [vmem:[%s1 + $0xe8] sm:$0xf]
  %v87 = vld [vmem:[%s1 + $0xec] sm:$0xf]
  %v88 = vld [vmem:[%s1 + $0xf0] sm:$0xf]
  %v89 = vld [vmem:[%s1 + $0xf4] sm:$0xf]
  %v90 = vld [vmem:[%s1 + $0xf8] sm:$0xf]
  %v91 = vld [vmem:[%s1 + $0xfc] sm:$0xf]
  %v92 = vld [vmem:[%s1 + $0x100] sm:$0xf]
  %v93 = vld [vmem:[%s1 + $0x104] sm:$0xf]
  %v94 = vld [vmem:[%s1 + $0x108] sm:$0xf]
  %v95 = vld [vmem:[%s1 + $0x10c] sm:$0xf]
  %v96 = vld [vmem:[%s1 + $0x110] sm:$0xf]
  %v97 = vld [vmem:[%s1 + $0x114] sm:$0xf]
  %v98 = vld [vmem:[%s1 + $0x118] sm:$0xf]
  %v99 = vld [vmem:[%s1 + $0x11c] sm:$0xf]
  %v100 = vld [vmem:[%s1 + $0x120] sm:$0xf]
  %v101 = vld [vmem:[%s1 + $0x124] sm:$0xf]
  %v102 = vld [vmem:[%s1 + $0x128] sm:$0xf]
  %v103 = vld [vmem:[%s1 + $0x12c] sm:$0xf]
  %v104 = vld [vmem:[%s1 + $0x130] sm:$0xf]
  %v105 = vld [vmem:[%s1 + $0x134] sm:$0xf]
  %v106 = vld [vmem:[%s1 + $0x138] sm:$0xf]
  %v107 = vld [vmem:[%s1 + $0x13c] sm:$0xf]
  %v108 = vld [vmem:[%s1 + $0x140] sm:$0xf]
  %v109 = vld [vmem:[%s1 + $0x144] sm:$0xf]
  %v110 = vld [vmem:[%s1 + $0x148] sm:$0xf]
  %v111 = vld [vmem:[%s1 + $0x14c] sm:$0xf]
  %v112 = vld [vmem:[%s1 + $0x150] sm:$0xf]
  %v113 = vld [vmem:[%s1 + $0x154] sm:$0xf]
  %v114 = vld [vmem:[%s1 + $0x158] sm:$0xf]
  %v115 = vld [vmem:[%s1 + $0x15c] sm:$0xf]
  %v116 = vld [vmem:[%s1 + $0x160] sm:$0xf]
  %v117 = vld [vmem:[%s1 + $0x164] sm:$0xf]
  %v118 = vld [vmem:[%s1 + $0x168] sm:$0xf]
  %v119 = vld [vmem:[%s1 + $0x16c] sm:$0xf]
  %v120 = vld [vmem:[%s1 + $0x170] sm:$0xf]
  %v121 = vld [vmem:[%s1 + $0x174] sm:$0xf]
  %v122 = vld [vmem:[%s1 + $0x178] sm:$0xf]
  %v123 = vld [vmem:[%s1 + $0x17c] sm:$0xf]
  %v124 = vld [vmem:[%s1 + $0x180] sm:$0xf]
  %v125 = vld [vmem:[%s1 + $0x184] sm:$0xf]
  %v126 = vld [vmem:[%s1 + $0x188] sm:$0xf]
  %v127 = vld [vmem:[%s1 + $0x18c] sm:$0xf]
  %v128 = vld [vmem:[%s1 + $0x190] sm:$0xf]
  %v129 = vld [vmem:[%s1 + $0x194] sm:$0xf]
  %v130 = vld [vmem:[%s1 + $0x198] sm:$0xf]
  %v131 = vld [vmem:[%s1 + $0x19c] sm:$0xf]
  %v132 = vld [vmem:[%s1 + $0x1a0] sm:$0xf]
  %v133 = vld [vmem:[%s1 + $0x1a4] sm:$0xf]
  %v134 = vld [vmem:[%s1 + $0x1a8] sm:$0xf]
  %v135 = vld [vmem:[%s1 + $0x1ac] sm:$0xf]
  %v136 = vld [vmem:[%s1 + $0x1b0] sm:$0xf]
  %v137 = vld [vmem:[%s1 + $0x1b4] sm:$0xf]
  %v138 = vld [vmem:[%s1 + $0x1b8] sm:$0xf]
  %v139 = vld [vmem:[%s1 + $0x1bc] sm:$0xf]
  %v140 = vld [vmem:[%s1 + $0x1c0] sm:$0xf]
  %v141 = vld [vmem:[%s1 + $0x1c4] sm:$0xf]
  %v142 = vld [vmem:[%s1 + $0x1c8] sm:$0xf]
  %v143 = vld [vmem:[%s1 + $0x1cc] sm:$0xf]
  %v144 = vld [vmem:[%s1 + $0x1d0] sm:$0xf]
  %v145 = vld [vmem:[%s1 + $0x1d4] sm:$0xf]
  %v146 = vld [vmem:[%s1 + $0x1d8] sm:$0xf]
  %v147 = vld [vmem:[%s1 + $0x1dc] sm:$0xf]
  %v148 = vld [vmem:[%s1 + $0x1e0] sm:$0xf]
  %v149 = vld [vmem:[%s1 + $0x1e4] sm:$0xf]
  %v150 = vld [vmem:[%s1 + $0x1e8] sm:$0xf]
  %v151 = vld [vmem:[%s1 + $0x1ec] sm:$0xf]
  %v152 = vld [vmem:[%s1 + $0x1f0] sm:$0xf]
  %v153 = vld [vmem:[%s1 + $0x1f4] sm:$0xf]
  %v154 = vld [vmem:[%s1 + $0x1f8] sm:$0xf]
  %v155 = vld [vmem:[%s1 + $0x1fc] sm:$0xf]
  %v156 = vld [vmem:[%s2] sm:$0x1]
  %v158 = vperm.slane %v156, 0
  %v164 = vunpack.c.l.b16 %v24
  %v165 = vunpack.c.h.b16 %v24
  %v166 = vunpack.c.l.b16 %v25
  %v167 = vunpack.c.h.b16 %v25
  %v168 = vunpack.c.l.b16 %v26
  %v169 = vunpack.c.h.b16 %v26
  %v170 = vunpack.c.l.b16 %v27
  %v171 = vunpack.c.h.b16 %v27
  %v172 = vpack.c.b16 %v164, %v164
  %v173 = vpack.c.b16 %v165, %v165
  %v174 = vpack.c.b16 %v166, %v166
  %v175 = vpack.c.b16 %v167, %v167
  %v176 = vpack.c.b16 %v168, %v168
  %v177 = vpack.c.b16 %v169, %v169
  %v178 = vpack.c.b16 %v170, %v170
  %v179 = vpack.c.b16 %v171, %v171
  %v316 = vunpack.c.l.b16 %v28
  %v317 = vunpack.c.l.b16 %v29
  %v318 = vunpack.c.l.b16 %v30
  %v319 = vunpack.c.l.b16 %v31
  %v320 = vunpack.c.l.b16 %v32
  %v321 = vunpack.c.l.b16 %v33
  %v322 = vunpack.c.l.b16 %v34
  %v323 = vunpack.c.l.b16 %v35
  %v324 = vunpack.c.l.b16 %v36
  %v325 = vunpack.c.l.b16 %v37
  %v326 = vunpack.c.l.b16 %v38
  %v327 = vunpack.c.l.b16 %v39
  %v328 = vunpack.c.l.b16 %v40
  %v329 = vunpack.c.l.b16 %v41
  %v330 = vunpack.c.l.b16 %v42
  %v331 = vunpack.c.l.b16 %v43
  %v332 = vunpack.c.l.b16 %v44
  %v333 = vunpack.c.l.b16 %v45
  %v334 = vunpack.c.l.b16 %v46
  %v335 = vunpack.c.l.b16 %v47
  %v336 = vunpack.c.l.b16 %v48
  %v337 = vunpack.c.l.b16 %v49
  %v338 = vunpack.c.l.b16 %v50
  %v339 = vunpack.c.l.b16 %v51
  %v340 = vunpack.c.l.b16 %v52
  %v341 = vunpack.c.l.b16 %v53
  %v342 = vunpack.c.l.b16 %v54
  %v343 = vunpack.c.l.b16 %v55
  %v344 = vunpack.c.l.b16 %v56
  %v345 = vunpack.c.l.b16 %v57
  %v346 = vunpack.c.l.b16 %v58
  %v347 = vunpack.c.l.b16 %v59
  %v348 = vunpack.c.l.b16 %v60
  %v349 = vunpack.c.l.b16 %v61
  %v350 = vunpack.c.l.b16 %v62
  %v351 = vunpack.c.l.b16 %v63
  %v352 = vunpack.c.l.b16 %v64
  %v353 = vunpack.c.l.b16 %v65
  %v354 = vunpack.c.l.b16 %v66
  %v355 = vunpack.c.l.b16 %v67
  %v356 = vunpack.c.l.b16 %v68
  %v357 = vunpack.c.l.b16 %v69
  %v358 = vunpack.c.l.b16 %v70
  %v359 = vunpack.c.l.b16 %v71
  %v360 = vunpack.c.l.b16 %v72
  %v361 = vunpack.c.l.b16 %v73
  %v362 = vunpack.c.l.b16 %v74
  %v363 = vunpack.c.l.b16 %v75
  %v364 = vunpack.c.l.b16 %v76
  %v365 = vunpack.c.l.b16 %v77
  %v366 = vunpack.c.l.b16 %v78
  %v367 = vunpack.c.l.b16 %v79
  %v368 = vunpack.c.l.b16 %v80
  %v369 = vunpack.c.l.b16 %v81
  %v370 = vunpack.c.l.b16 %v82
  %v371 = vunpack.c.l.b16 %v83
  %v372 = vunpack.c.l.b16 %v84
  %v373 = vunpack.c.l.b16 %v85
  %v374 = vunpack.c.l.b16 %v86
  %v375 = vunpack.c.l.b16 %v87
  %v376 = vunpack.c.l.b16 %v88
  %v377 = vunpack.c.l.b16 %v89
  %v378 = vunpack.c.l.b16 %v90
  %v379 = vunpack.c.l.b16 %v91
  %v380 = vunpack.c.l.b16 %v92
  %v381 = vunpack.c.l.b16 %v93
  %v382 = vunpack.c.l.b16 %v94
  %v383 = vunpack.c.l.b16 %v95
  %v384 = vunpack.c.l.b16 %v96
  %v385 = vunpack.c.l.b16 %v97
  %v386 = vunpack.c.l.b16 %v98
  %v387 = vunpack.c.l.b16 %v99
  %v388 = vunpack.c.l.b16 %v100
  %v389 = vunpack.c.l.b16 %v101
  %v390 = vunpack.c.l.b16 %v102
  %v391 = vunpack.c.l.b16 %v103
  %v392 = vunpack.c.l.b16 %v104
  %v393 = vunpack.c.l.b16 %v105
  %v394 = vunpack.c.l.b16 %v106
  %v395 = vunpack.c.l.b16 %v107
  %v396 = vunpack.c.l.b16 %v108
  %v397 = vunpack.c.l.b16 %v109
  %v398 = vunpack.c.l.b16 %v110
  %v399 = vunpack.c.l.b16 %v111
  %v400 = vunpack.c.l.b16 %v112
  %v401 = vunpack.c.l.b16 %v113
  %v402 = vunpack.c.l.b16 %v114
  %v403 = vunpack.c.l.b16 %v115
  %v404 = vunpack.c.l.b16 %v116
  %v405 = vunpack.c.l.b16 %v117
  %v406 = vunpack.c.l.b16 %v118
  %v407 = vunpack.c.l.b16 %v119
  %v408 = vunpack.c.l.b16 %v120
  %v409 = vunpack.c.l.b16 %v121
  %v410 = vunpack.c.l.b16 %v122
  %v411 = vunpack.c.l.b16 %v123
  %v412 = vunpack.c.l.b16 %v124
  %v413 = vunpack.c.l.b16 %v125
  %v414 = vunpack.c.l.b16 %v126
  %v415 = vunpack.c.l.b16 %v127
  %v416 = vunpack.c.l.b16 %v128
  %v417 = vunpack.c.l.b16 %v129
  %v418 = vunpack.c.l.b16 %v130
  %v419 = vunpack.c.l.b16 %v131
  %v420 = vunpack.c.l.b16 %v132
  %v421 = vunpack.c.l.b16 %v133
  %v422 = vunpack.c.l.b16 %v134
  %v423 = vunpack.c.l.b16 %v135
  %v424 = vunpack.c.l.b16 %v136
  %v425 = vunpack.c.l.b16 %v137
  %v426 = vunpack.c.l.b16 %v138
  %v427 = vunpack.c.l.b16 %v139
  %v428 = vunpack.c.l.b16 %v140
  %v429 = vunpack.c.l.b16 %v141
  %v430 = vunpack.c.l.b16 %v142
  %v431 = vunpack.c.l.b16 %v143
  %v432 = vunpack.c.l.b16 %v144
  %v433 = vunpack.c.l.b16 %v145
  %v434 = vunpack.c.l.b16 %v146
  %v435 = vunpack.c.l.b16 %v147
  %v436 = vunpack.c.l.b16 %v148
  %v437 = vunpack.c.l.b16 %v149
  %v438 = vunpack.c.l.b16 %v150
  %v439 = vunpack.c.l.b16 %v151
  %v440 = vunpack.c.l.b16 %v152
  %v441 = vunpack.c.l.b16 %v153
  %v442 = vunpack.c.l.b16 %v154
  %v443 = vunpack.c.l.b16 %v155
  %v444 = vpack.c.b16 %v317, %v316
  %v445 = vpack.c.b16 %v319, %v318
  %v446 = vpack.c.b16 %v321, %v320
  %v447 = vpack.c.b16 %v323, %v322
  %v448 = vpack.c.b16 %v325, %v324
  %v449 = vpack.c.b16 %v327, %v326
  %v450 = vpack.c.b16 %v329, %v328
  %v451 = vpack.c.b16 %v331, %v330
  %v452 = vpack.c.b16 %v333, %v332
  %v453 = vpack.c.b16 %v335, %v334
  %v454 = vpack.c.b16 %v337, %v336
  %v455 = vpack.c.b16 %v339, %v338
  %v456 = vpack.c.b16 %v341, %v340
  %v457 = vpack.c.b16 %v343, %v342
  %v458 = vpack.c.b16 %v345, %v344
  %v459 = vpack.c.b16 %v347, %v346
  %v460 = vpack.c.b16 %v349, %v348
  %v461 = vpack.c.b16 %v351, %v350
  %v462 = vpack.c.b16 %v353, %v352
  %v463 = vpack.c.b16 %v355, %v354
  %v464 = vpack.c.b16 %v357, %v356
  %v465 = vpack.c.b16 %v359, %v358
  %v466 = vpack.c.b16 %v361, %v360
  %v467 = vpack.c.b16 %v363, %v362
  %v468 = vpack.c.b16 %v365, %v364
  %v469 = vpack.c.b16 %v367, %v366
  %v470 = vpack.c.b16 %v369, %v368
  %v471 = vpack.c.b16 %v371, %v370
  %v472 = vpack.c.b16 %v373, %v372
  %v473 = vpack.c.b16 %v375, %v374
  %v474 = vpack.c.b16 %v377, %v376
  %v475 = vpack.c.b16 %v379, %v378
  %v476 = vpack.c.b16 %v381, %v380
  %v477 = vpack.c.b16 %v383, %v382
  %v478 = vpack.c.b16 %v385, %v384
  %v479 = vpack.c.b16 %v387, %v386
  %v480 = vpack.c.b16 %v389, %v388
  %v481 = vpack.c.b16 %v391, %v390
  %v482 = vpack.c.b16 %v393, %v392
  %v483 = vpack.c.b16 %v395, %v394
  %v484 = vpack.c.b16 %v397, %v396
  %v485 = vpack.c.b16 %v399, %v398
  %v486 = vpack.c.b16 %v401, %v400
  %v487 = vpack.c.b16 %v403, %v402
  %v488 = vpack.c.b16 %v405, %v404
  %v489 = vpack.c.b16 %v407, %v406
  %v490 = vpack.c.b16 %v409, %v408
  %v491 = vpack.c.b16 %v411, %v410
  %v492 = vpack.c.b16 %v413, %v412
  %v493 = vpack.c.b16 %v415, %v414
  %v494 = vpack.c.b16 %v417, %v416
  %v495 = vpack.c.b16 %v419, %v418
  %v496 = vpack.c.b16 %v421, %v420
  %v497 = vpack.c.b16 %v423, %v422
  %v498 = vpack.c.b16 %v425, %v424
  %v499 = vpack.c.b16 %v427, %v426
  %v500 = vpack.c.b16 %v429, %v428
  %v501 = vpack.c.b16 %v431, %v430
  %v502 = vpack.c.b16 %v433, %v432
  %v503 = vpack.c.b16 %v435, %v434
  %v504 = vpack.c.b16 %v437, %v436
  %v505 = vpack.c.b16 %v439, %v438
  %v506 = vpack.c.b16 %v441, %v440
  %v507 = vpack.c.b16 %v443, %v442
  %572 = vmatpush.bf16.msra.mxu0 %v451
  %573 = vmatpush.bf16.msra.mxu0 %v450
  %574 = vmatpush.bf16.msra.mxu0 %v449
  %575 = vmatpush.bf16.msra.mxu0 %v448
  %576 = vmatpush.bf16.msra.mxu0 %v447
  %577 = vmatpush.bf16.msra.mxu0 %v446
  %578 = vmatpush.bf16.msra.mxu0 %v445
  %579 = vmatpush.bf16.msra.mxu0 %v444
  %580 = vmatmul.bf16.gmra.mxu0 %v172
  %v581 = vpop.f32.mrf.mxu0
  %v582 = vadd.f32 %v158, %v581
  %v583 = vpop.f32.mrf.mxu0
  %584 = vdwg.mxu0
  %585 = vmatpush.bf16.msra.mxu0 %v459
  %586 = vmatpush.bf16.msra.mxu0 %v458
  %587 = vmatpush.bf16.msra.mxu0 %v457
  %588 = vmatpush.bf16.msra.mxu0 %v456
  %589 = vmatpush.bf16.msra.mxu0 %v455
  %590 = vmatpush.bf16.msra.mxu0 %v454
  %591 = vmatpush.bf16.msra.mxu0 %v453
  %592 = vmatpush.bf16.msra.mxu0 %v452
  %593 = vmatmul.bf16.gmra.mxu0 %v173
  %v594 = vpop.f32.mrf.mxu0
  %v595 = vadd.f32 %v582, %v594
  %v596 = vpop.f32.mrf.mxu0
  %597 = vdwg.mxu0
  %598 = vmatpush.bf16.msra.mxu0 %v467
  %599 = vmatpush.bf16.msra.mxu0 %v466
  %600 = vmatpush.bf16.msra.mxu0 %v465
  %601 = vmatpush.bf16.msra.mxu0 %v464
  %602 = vmatpush.bf16.msra.mxu0 %v463
  %603 = vmatpush.bf16.msra.mxu0 %v462
  %604 = vmatpush.bf16.msra.mxu0 %v461
  %605 = vmatpush.bf16.msra.mxu0 %v460
  %606 = vmatmul.bf16.gmra.mxu0 %v174
  %v607 = vpop.f32.mrf.mxu0
  %v608 = vadd.f32 %v595, %v607
  %v609 = vpop.f32.mrf.mxu0
  %610 = vdwg.mxu0
  %611 = vmatpush.bf16.msra.mxu0 %v475
  %612 = vmatpush.bf16.msra.mxu0 %v474
  %613 = vmatpush.bf16.msra.mxu0 %v473
  %614 = vmatpush.bf16.msra.mxu0 %v472
  %615 = vmatpush.bf16.msra.mxu0 %v471
  %616 = vmatpush.bf16.msra.mxu0 %v470
  %617 = vmatpush.bf16.msra.mxu0 %v469
  %618 = vmatpush.bf16.msra.mxu0 %v468
  %619 = vmatmul.bf16.gmra.mxu0 %v175
  %v620 = vpop.f32.mrf.mxu0
  %v621 = vadd.f32 %v608, %v620
  %v622 = vpop.f32.mrf.mxu0
  %623 = vdwg.mxu0
  %624 = vmatpush.bf16.msra.mxu0 %v483
  %625 = vmatpush.bf16.msra.mxu0 %v482
  %626 = vmatpush.bf16.msra.mxu0 %v481
  %627 = vmatpush.bf16.msra.mxu0 %v480
  %628 = vmatpush.bf16.msra.mxu0 %v479
  %629 = vmatpush.bf16.msra.mxu0 %v478
  %630 = vmatpush.bf16.msra.mxu0 %v477
  %631 = vmatpush.bf16.msra.mxu0 %v476
  %632 = vmatmul.bf16.gmra.mxu0 %v176
  %v633 = vpop.f32.mrf.mxu0
  %v634 = vadd.f32 %v621, %v633
  %v635 = vpop.f32.mrf.mxu0
  %636 = vdwg.mxu0
  %637 = vmatpush.bf16.msra.mxu0 %v491
  %638 = vmatpush.bf16.msra.mxu0 %v490
  %639 = vmatpush.bf16.msra.mxu0 %v489
  %640 = vmatpush.bf16.msra.mxu0 %v488
  %641 = vmatpush.bf16.msra.mxu0 %v487
  %642 = vmatpush.bf16.msra.mxu0 %v486
  %643 = vmatpush.bf16.msra.mxu0 %v485
  %644 = vmatpush.bf16.msra.mxu0 %v484
  %645 = vmatmul.bf16.gmra.mxu0 %v177
  %v646 = vpop.f32.mrf.mxu0
  %v647 = vadd.f32 %v634, %v646
  %v648 = vpop.f32.mrf.mxu0
  %649 = vdwg.mxu0
  %650 = vmatpush.bf16.msra.mxu0 %v499
  %651 = vmatpush.bf16.msra.mxu0 %v498
  %652 = vmatpush.bf16.msra.mxu0 %v497
  %653 = vmatpush.bf16.msra.mxu0 %v496
  %654 = vmatpush.bf16.msra.mxu0 %v495
  %655 = vmatpush.bf16.msra.mxu0 %v494
  %656 = vmatpush.bf16.msra.mxu0 %v493
  %657 = vmatpush.bf16.msra.mxu0 %v492
  %658 = vmatmul.bf16.gmra.mxu0 %v178
  %v659 = vpop.f32.mrf.mxu0
  %v660 = vadd.f32 %v647, %v659
  %v661 = vpop.f32.mrf.mxu0
  %662 = vdwg.mxu0
  %663 = vmatpush.bf16.msra.mxu0 %v507
  %664 = vmatpush.bf16.msra.mxu0 %v506
  %665 = vmatpush.bf16.msra.mxu0 %v505
  %666 = vmatpush.bf16.msra.mxu0 %v504
  %667 = vmatpush.bf16.msra.mxu0 %v503
  %668 = vmatpush.bf16.msra.mxu0 %v502
  %669 = vmatpush.bf16.msra.mxu0 %v501
  %670 = vmatpush.bf16.msra.mxu0 %v500
  %671 = vmatmul.bf16.gmra.mxu0 %v179
  %v672 = vpop.f32.mrf.mxu0
  %v673 = vadd.f32 %v660, %v672
  %v674 = vpop.f32.mrf.mxu0
  %675 = vdwg.mxu0
  %s676 = sld [smem:[#allocation2]]
  %vm677 = vcmp.gt.f32.partialorder %v673, 0.0
  %v678 = vstv %s676
  %v679 = vmul.f32 %v678, %v673
  %v680 = vsel %vm677, %v673, %v679
  %v681 = vld [vmem:[%s4] sm:$0x1]
  %v683 = vperm.slane %v681, 0
  %v685 = vld [vmem:[%s3] sm:$0x1]
  %687 = vset.pattern.permute.xlu0 0
  %688 = vperm.xlu0 %687, %v680
  %v689 = vpop.permute.xlu0 %688
  %v691 = vperm.slane %v685, 0
  %v692 = vmul.f32 %v689, %v691
  %v693 = vadd.f32 %v683, %v692
  %v694 = vld [vmem:[%s3 + $0x1] sm:$0x1]
  %695 = vset.pattern.permute.xlu0 1
  %696 = vperm.xlu0 %695, %v680
  %v697 = vpop.permute.xlu0 %696
  %v699 = vperm.slane %v694, 0
  %v700 = vmul.f32 %v697, %v699
  %v701 = vadd.f32 %v693, %v700
  %702 = vmax.xlane.f32.xlu0 %v701
  %v703 = vpop.xlane.xlu0 %702
  %v704 = vsub.f32 %v701, %v703
  %v705 = vmul.f32 %v704, 1.442695
  %v706 = vpow.pop %v705
  %707 = vadd.xlane.f32.xlu0 %v706
  %v708 = vpop.xlane.xlu0 %707
  %v709 = vlog2.pop %v708
  %v710 = vmul.f32 %v709, 0.6931472
  %v711 = vsub.f32 %v704, %v710
  %712 = vst [vmem:[%s6] sm:$0xff] %v711
  // Predicated region
  $region26: #{classification_net.1} parent=0 // pred_check
    _
  $region27: #{classification_net.1} parent=0 // pred_check_branch
    %714 = sbr.rel (0) target = $region29
  $region28: #{classification_net.1} parent=0 // pred_region
    _
  $region29: #{classification_net.1} parent=0 // pred_fallthru
    _
  // Predicated region
  $region30: #{classification_net.1} parent=0 // pred_check
    _
  $region31: #{classification_net.1} parent=0 // pred_check_branch
    %716 = sbr.rel (0) target = $region33
  $region32: #{classification_net.1} parent=0 // pred_region
    _
  $region33: #{classification_net.1} parent=0 // pred_fallthru
    _

</llo_original>
